<compile_context>
chip_gen: v7x
topology: tpu7x:2x2x1
jax: 0.10.0
libtpu: 0.0.40
codegen_flags: <defaults>
</compile_context>

<pallas_src>
import jax
import jax.numpy as jnp
from jax.experimental import pallas as pl
from jax.experimental.pallas import tpu as pltpu

EPS = 1e-6


def _residual_kernel(alpha_ref, bias_ref, x_ref, w_ref, b_ref, o_ref):
    # x_ref: (TM, D) f32   w_ref: (D, D) bf16   b_ref: (1, D) f32
    # alpha_ref/bias_ref: SMEM scalars          o_ref: (TM, D)
    x = x_ref[...].astype(jnp.float32)          # load once; reused for residual
    d = x.shape[-1]

    # ---- LayerNormalization (torch semantics: unbiased std, eps outside sqrt) ----
    mean = jnp.mean(x, axis=-1, keepdims=True)
    centered = x - mean
    var_unbiased = jnp.sum(centered * centered, axis=-1, keepdims=True) / (d - 1)
    std = jnp.sqrt(var_unbiased)
    inv = pl.reciprocal(std + EPS, approx=True)   # EUP slot, off the VALU
    xn = alpha_ref[0] * centered * inv + bias_ref[0]

    # ---- sublayer: dense projection, bf16 operands + f32 accumulation on the MXU ----
    y = jnp.dot(xn.astype(jnp.bfloat16), w_ref[...],
                preferred_element_type=jnp.float32) + b_ref[...]

    # ---- dropout (eval mode => identity) + residual add (x already in vregs) ----
    o_ref[...] = (x + y).astype(o_ref.dtype)


def _round_up(n, m):
    return ((n + m - 1) // m) * m


def residual_connection(x, w, b, alpha, bias, *, tm=256):
    """out = x + (LayerNorm(x) @ W + b); dropout is identity (eval mode).

    x: (B, S, D) f32; w: (D, D) (cast to bf16 for the MXU); b: (D,);
    alpha, bias: scalar LayerNorm parameters.
    """
    B, S, D = x.shape
    rows = B * S

    # Effective row tile: as large as requested, but never larger than the
    # (padded) row count; keep it a multiple of 8 (sublane granularity).
    tm_eff = min(tm, _round_up(rows, 8))
    rows_p = _round_up(rows, tm_eff)

    x2 = x.reshape(rows, D)
    if rows_p != rows:
        # Zero padding is safe: var uses /(D-1) with D>1, so no NaN; padded
        # rows are discarded after the call.
        x2 = jnp.pad(x2, ((0, rows_p - rows), (0, 0)))

    w_bf16 = w.astype(jnp.bfloat16)               # native MXU dtype, half VMEM
    b2 = b.astype(jnp.float32).reshape(1, D)
    alpha1 = jnp.asarray(alpha, jnp.float32).reshape(1)
    bias1 = jnp.asarray(bias, jnp.float32).reshape(1)

    out2 = pl.pallas_call(
        _residual_kernel,
        out_shape=jax.ShapeDtypeStruct((rows_p, D), x.dtype),
        grid_spec=pltpu.PrefetchScalarGridSpec(
            num_scalar_prefetch=0,
            grid=(rows_p // tm_eff,),
            in_specs=[
                pl.BlockSpec(memory_space=pltpu.SMEM),          # alpha (scalar)
                pl.BlockSpec(memory_space=pltpu.SMEM),          # bias  (scalar)
                pl.BlockSpec((tm_eff, D), lambda i: (i, 0)),    # x row tile
                pl.BlockSpec((D, D), lambda i: (0, 0)),         # W (resident, bf16)
                pl.BlockSpec((1, D), lambda i: (0, 0)),         # b
            ],
            out_specs=pl.BlockSpec((tm_eff, D), lambda i: (i, 0)),
        ),
        compiler_params=pltpu.CompilerParams(
            dimension_semantics=("parallel",),
            vmem_limit_bytes=64 * 1024 * 1024,
        ),
    )(alpha1, bias1, x2, w_bf16, b2)

    if rows_p != rows:
        out2 = out2[:rows]
    return out2.reshape(B, S, D)


def _reference(x, w, b, alpha, bias):
    # Pure f32 reference (torch semantics: unbiased std, eps outside sqrt).
    mean = jnp.mean(x, axis=-1, keepdims=True)
    var = jnp.sum((x - mean) ** 2, axis=-1, keepdims=True) / (x.shape[-1] - 1)
    std = jnp.sqrt(var)
    xn = alpha * (x - mean) / (std + EPS) + bias
    y = jnp.einsum("bsd,de->bse", xn, w) + b
    return x + y  # dropout identity in eval mode


if __name__ == "__main__":
    key = jax.random.PRNGKey(0)
    kx, kw, kb, kx2, kw2, kb2 = jax.random.split(key, 6)

    # LayerNormalization parameters as in __init__: alpha=1, bias=0
    alpha = jnp.float32(1.0)
    bias = jnp.float32(0.0)

    # --- small shape consistent with the module: batch=2, seq=8, hidden=32 ---
    B, S, D = 2, 8, 32
    x = jax.random.normal(kx, (B, S, D), dtype=jnp.float32)
    w = jax.random.normal(kw, (D, D), dtype=jnp.float32) * 0.05
    b = jax.random.normal(kb, (D,), dtype=jnp.float32) * 0.01

    out = jax.block_until_ready(residual_connection(x, w, b, alpha, bias))
    ref = _reference(x, w, b, alpha, bias)
    assert out.shape == (B, S, D)
    # bf16 matmul operands + approx reciprocal vs pure-f32 reference.
    assert jnp.allclose(out, ref, atol=3e-2, rtol=3e-2), "mismatch vs reference (small)"

    # --- second shape exercising the 256-row tile and the tail-padding path ---
    B2, S2, D2 = 2, 520, 256          # rows=1040 -> tm_eff=256, grid=5, 240 padded rows
    x_b = jax.random.normal(kx2, (B2, S2, D2), dtype=jnp.float32)
    w_b = jax.random.normal(kw2, (D2, D2), dtype=jnp.float32) * 0.02
    b_b = jax.random.normal(kb2, (D2,), dtype=jnp.float32) * 0.01

    out_b = jax.block_until_ready(residual_connection(x_b, w_b, b_b, alpha, bias, tm=256))
    ref_b = _reference(x_b, w_b, b_b, alpha, bias)
    assert out_b.shape == (B2, S2, D2)
    assert jnp.allclose(out_b, ref_b, atol=3e-2, rtol=3e-2), "mismatch vs reference (padded)"

    print("KERNEL_OK")
</pallas_src>

<mosaic_0001>
module attributes {stable_mosaic.version = 11 : i64} {
  func.func @_residual_kernel(%arg0: i32, %arg1: memref<1xf32, #tpu.memory_space<smem>>, %arg2: memref<1xf32, #tpu.memory_space<smem>>, %arg3: memref<16x32xf32, #tpu.memory_space<vmem>>, %arg4: memref<32x32xbf16, #tpu.memory_space<vmem>>, %arg5: memref<1x32xf32, #tpu.memory_space<vmem>>, %arg6: memref<16x32xf32, #tpu.memory_space<vmem>>) attributes {dimension_semantics = [#tpu.dimension_semantics<parallel>], iteration_bounds = array<i64: 1>, scalar_prefetch = 0 : i64, scratch_operands = 0 : i64, tpu.core_type = #tpu.core_type<tc>, window_params = [{transform_indices = @transform_0, window_bounds = array<i64: 1>}, {transform_indices = @transform_1, window_bounds = array<i64: 1>}, {transform_indices = @transform_2, window_bounds = array<i64: 16, 32>}, {pipeline_mode = #tpu.pipeline_mode<synchronous>, transform_indices = @transform_3, window_bounds = array<i64: 32, 32>}, {pipeline_mode = #tpu.pipeline_mode<synchronous>, transform_indices = @transform_4, window_bounds = array<i64: 1, 32>}, {transform_indices = @transform_5, window_bounds = array<i64: 16, 32>}]} {
    %c0 = arith.constant 0 : index
    %c0_0 = arith.constant 0 : index
    %0 = vector.load %arg3[%c0, %c0_0] : memref<16x32xf32, #tpu.memory_space<vmem>>, vector<16x32xf32>
    %cst = arith.constant dense<0.000000e+00> : vector<16xf32>
    %1 = vector.multi_reduction <add>, %0, %cst [1] : vector<16x32xf32> to vector<16xf32>
    %2 = vector.shape_cast %1 : vector<16xf32> to vector<16x1xf32>
    %cst_1 = arith.constant 3.200000e+01 : f32
    %3 = vector.broadcast %cst_1 : f32 to vector<16x1xf32>
    %4 = arith.divf %2, %3 : vector<16x1xf32>
    %5 = vector.broadcast %4 : vector<16x1xf32> to vector<16x32xf32>
    %6 = arith.subf %0, %5 : vector<16x32xf32>
    %7 = arith.mulf %6, %6 : vector<16x32xf32>
    %cst_2 = arith.constant dense<0.000000e+00> : vector<16xf32>
    %8 = vector.multi_reduction <add>, %7, %cst_2 [1] : vector<16x32xf32> to vector<16xf32>
    %9 = vector.shape_cast %8 : vector<16xf32> to vector<16x1xf32>
    %cst_3 = arith.constant 3.100000e+01 : f32
    %10 = vector.broadcast %cst_3 : f32 to vector<16x1xf32>
    %11 = arith.divf %9, %10 : vector<16x1xf32>
    %12 = math.sqrt %11 : vector<16x1xf32>
    %cst_4 = arith.constant 9.99999997E-7 : f32
    %13 = vector.broadcast %cst_4 : f32 to vector<16x1xf32>
    %14 = arith.addf %12, %13 : vector<16x1xf32>
    %15 = tpu.reciprocal %14 {approx = true} : vector<16x1xf32> -> vector<16x1xf32>
    %c0_5 = arith.constant 0 : index
    %16 = memref.load %arg1[%c0_5] : memref<1xf32, #tpu.memory_space<smem>>
    %17 = vector.broadcast %16 : f32 to vector<16x32xf32>
    %18 = arith.mulf %17, %6 : vector<16x32xf32>
    %19 = vector.broadcast %15 : vector<16x1xf32> to vector<16x32xf32>
    %20 = arith.mulf %18, %19 : vector<16x32xf32>
    %c0_6 = arith.constant 0 : index
    %21 = memref.load %arg2[%c0_6] : memref<1xf32, #tpu.memory_space<smem>>
    %22 = vector.broadcast %21 : f32 to vector<16x32xf32>
    %23 = arith.addf %20, %22 : vector<16x32xf32>
    %24 = arith.truncf %23 : vector<16x32xf32> to vector<16x32xbf16>
    %c0_7 = arith.constant 0 : index
    %c0_8 = arith.constant 0 : index
    %25 = vector.load %arg4[%c0_7, %c0_8] : memref<32x32xbf16, #tpu.memory_space<vmem>>, vector<32x32xbf16>
    %cst_9 = arith.constant dense<0.000000e+00> : vector<16x32xf32>
    %26 = tpu.matmul %24, %25, %cst_9 {dimension_numbers = #tpu.dot_dimension_numbers<[1], [0], [0], [1], [0, 0, 1, 1], [], []>} : vector<16x32xbf16>, vector<32x32xbf16>, vector<16x32xf32> -> vector<16x32xf32>
    %c0_10 = arith.constant 0 : index
    %c0_11 = arith.constant 0 : index
    %27 = vector.load %arg5[%c0_10, %c0_11] : memref<1x32xf32, #tpu.memory_space<vmem>>, vector<1x32xf32>
    %28 = vector.broadcast %27 : vector<1x32xf32> to vector<16x32xf32>
    %29 = arith.addf %26, %28 : vector<16x32xf32>
    %30 = arith.addf %0, %29 : vector<16x32xf32>
    %c0_12 = arith.constant 0 : index
    %c0_13 = arith.constant 0 : index
    %31 = vector.load %arg6[%c0_12, %c0_13] : memref<16x32xf32, #tpu.memory_space<vmem>>, vector<16x32xf32>
    tpu.vector_store %arg6[%c0_12, %c0_13], %30 {strides = array<i32>} : memref<16x32xf32, #tpu.memory_space<vmem>>, vector<16x32xf32>,
    return
  }
  func.func @transform_0(%arg0: i32) -> i32 {
    %c0_i32 = arith.constant 0 : i32
    %c0_i32_0 = arith.constant 0 : i32
    return %c0_i32 : i32
  }
  func.func @transform_1(%arg0: i32) -> i32 {
    %c0_i32 = arith.constant 0 : i32
    %c0_i32_0 = arith.constant 0 : i32
    return %c0_i32 : i32
  }
  func.func @transform_2(%arg0: i32) -> (i32, i32) {
    %c0_i32 = arith.constant 0 : i32
    %c0_i32_0 = arith.constant 0 : i32
    return %arg0, %c0_i32 : i32, i32
  }
  func.func @transform_3(%arg0: i32) -> (i32, i32) {
    %c0_i32 = arith.constant 0 : i32
    %c0_i32_0 = arith.constant 0 : i32
    %c0_i32_1 = arith.constant 0 : i32
    return %c0_i32, %c0_i32_0 : i32, i32
  }
  func.func @transform_4(%arg0: i32) -> (i32, i32) {
    %c0_i32 = arith.constant 0 : i32
    %c0_i32_0 = arith.constant 0 : i32
    %c0_i32_1 = arith.constant 0 : i32
    return %c0_i32, %c0_i32_0 : i32, i32
  }
  func.func @transform_5(%arg0: i32) -> (i32, i32) {
    %c0_i32 = arith.constant 0 : i32
    %c0_i32_0 = arith.constant 0 : i32
    return %arg0, %c0_i32 : i32, i32
  }
}

</mosaic_0001>

<llo_original>
// kernel: tpu_custom_call.1
$region0: #{tpu_custom_call.1}
  #allocation0 [shape = 'u32[]', space=smem, size = 0x4, offset = 0x4, fixed_abs, tag = 'smem constant byte address 0x4 - core index']
  #allocation1 [shape = 'u32[144,128]{1,0:T(1,128)}', space=vmem, size = 0x12000, scoped, tag = 'internal scratch']
  #allocation2 [shape = 'f32[1]{0:T(128)S(6)}', space=smem, size = 0x200, scoped, tag = 'scoped memory for tpu_custom_call.1']
  #allocation3 [shape = 'f32[1]{0:T(128)S(6)}', space=smem, size = 0x200, scoped, tag = 'scoped memory for tpu_custom_call.1']
  %s0 = inlined_call_operand.<no memory space> [shape: f32[1], index: 0, kind: input, shape index: {}]
  %s1 = inlined_call_operand.<no memory space> [shape: f32[1], index: 1, kind: input, shape index: {}]
  %s2 = inlined_call_operand.hbm [shape: f32[16,32], index: 2, kind: input, shape index: {}]
  %s3 = inlined_call_operand.hbm [shape: bf16[32,32], index: 3, kind: input, shape index: {}]
  %s4 = inlined_call_operand.hbm [shape: f32[1,32], index: 4, kind: input, shape index: {}]
  %s5 = inlined_call_operand.hbm [shape: f32[16,32], index: 5, kind: output, shape index: {}]
  %s6 = sld [smem:[#allocation0]]
  $region42: #{tpu_custom_call.1} parent=0
    _
  %s8 = ssub.s32 1, %s6
  %s9 = scalar_select 0, %s8, %s6
  %10 = sst [smem:[#allocation2]] %s0
  %11 = sst [smem:[#allocation3]] %s1
  $region1: #{tpu_custom_call.1} parent=0
    #allocation4 [shape = 'u8[8192]{0}', space=vmem, size = 0x2000, scoped, tag = 'input window, operand 2, single buffered']
    #allocation5 [shape = 's32[1]{0}', space=sflag, size = 0x4, scoped, tag = 'scoped memory for tpu_custom_call.1']
    #allocation6 [shape = 's32[1]{0}', space=sflag, size = 0x4, scoped, tag = 'scoped memory for tpu_custom_call.1']
    #allocation7 [shape = 'u8[8192]{0}', space=vmem, size = 0x2000, scoped, tag = 'input window, operand 3, single buffered']
    #allocation8 [shape = 's32[1]{0}', space=sflag, size = 0x4, scoped, tag = 'scoped memory for tpu_custom_call.1']
    #allocation9 [shape = 'u8[512]{0}', space=vmem, size = 0x400, scoped, tag = 'input window, operand 4, single buffered']
    #allocation10 [shape = 'u8[8192]{0}', space=vmem, size = 0x2000, scoped, tag = 'output window, operand 0, single buffered']
    %12 = vsyncpa [#allocation5], 0
    %13 = vsyncpa [#allocation8], 0
    %14 = vsyncpa [#allocation6], 0
    // Predicated region
    $region2: #{tpu_custom_call.1} parent=1 // pred_check
      _
    $region3: #{tpu_custom_call.1} parent=1 // pred_check_branch
      %16 = sbr.rel (0) target = $region5
    $region4: #{tpu_custom_call.1} parent=1 // pred_region
      _
    $region5: #{tpu_custom_call.1} parent=1 // pred_fallthru
      _
    // Predicated region
    $region6: #{tpu_custom_call.1} parent=1 // pred_check
      _
    $region7: #{tpu_custom_call.1} parent=1 // pred_check_branch
      %18 = sbr.rel (0) target = $region9
    $region8: #{tpu_custom_call.1} parent=1 // pred_region
      _
    $region9: #{tpu_custom_call.1} parent=1 // pred_fallthru
      _
    // Predicated region
    $region10: #{tpu_custom_call.1} parent=1 // pred_check
      _
    $region11: #{tpu_custom_call.1} parent=1 // pred_check_branch
      %20 = sbr.rel (0) target = $region13
    $region12: #{tpu_custom_call.1} parent=1 // pred_region
      %s22 = ssub.s32 256, 256
      %23 = vsyncadd [#allocation5], %s22
      %s24 = sshll.u32 [#allocation4], 4
      %s25 = int_to_ptr.vmem [resolvable:$true] %s24
      %30 = dma.hbm_to_vmem [thread:$0]  %s2, 256, %s25, [#allocation5], 128, 128, 8
    $region13: #{tpu_custom_call.1} parent=1 // pred_fallthru
      _
    // Predicated region
    $region14: #{tpu_custom_call.1} parent=1 // pred_check
      _
    $region15: #{tpu_custom_call.1} parent=1 // pred_check_branch
      %32 = sbr.rel (0) target = $region17
    $region16: #{tpu_custom_call.1} parent=1 // pred_region
      %s34 = ssub.s32 256, 256
      %35 = vsyncadd [#allocation8], %s34
      %s36 = sshll.u32 [#allocation7], 4
      %s37 = int_to_ptr.vmem [resolvable:$true] %s36
      %42 = dma.hbm_to_vmem [thread:$0]  %s3, 256, %s37, [#allocation8], 64, 64, 4
    $region17: #{tpu_custom_call.1} parent=1 // pred_fallthru
      _
    // Predicated region
    $region18: #{tpu_custom_call.1} parent=1 // pred_check
      _
    $region19: #{tpu_custom_call.1} parent=1 // pred_check_branch
      %44 = sbr.rel (0) target = $region21
    $region20: #{tpu_custom_call.1} parent=1 // pred_region
      %s46 = ssub.s32 16, 16
      %47 = vsyncadd [#allocation8], %s46
      %s49 = sshll.u32 [#allocation9], 4
      %s50 = int_to_ptr.vmem [resolvable:$true] %s49
      %52 = dma.hbm_to_vmem [thread:$0]  %s4, 16, %s50, [#allocation8]
    $region21: #{tpu_custom_call.1} parent=1 // pred_fallthru
      _
    // Predicated region
    $region22: #{tpu_custom_call.1} parent=1 // pred_check
      _
    $region23: #{tpu_custom_call.1} parent=1 // pred_check_branch
      %54 = sbr.rel (0) target = $region25
    $region24: #{tpu_custom_call.1} parent=1 // pred_region
      %55 = dma.done [#allocation5], 256
    $region25: #{tpu_custom_call.1} parent=1 // pred_fallthru
      _
    // Predicated region
    $region26: #{tpu_custom_call.1} parent=1 // pred_check
      _
    $region27: #{tpu_custom_call.1} parent=1 // pred_check_branch
      %57 = sbr.rel (0) target = $region29
    $region28: #{tpu_custom_call.1} parent=1 // pred_region
      %58 = dma.done [#allocation8], 256
    $region29: #{tpu_custom_call.1} parent=1 // pred_fallthru
      _
    // Predicated region
    $region30: #{tpu_custom_call.1} parent=1 // pred_check
      _
    $region31: #{tpu_custom_call.1} parent=1 // pred_check_branch
      %60 = sbr.rel (0) target = $region33
    $region32: #{tpu_custom_call.1} parent=1 // pred_region
      %61 = dma.done [#allocation8], 16
    $region33: #{tpu_custom_call.1} parent=1 // pred_fallthru
      _
    %v63 = vld [vmem:[#allocation4] sm:$0xff]
    %v64 = vld [vmem:[#allocation4 + $0x8] sm:$0xff]
    %vm65 = vcmask 261120
    %v66 = vsel %vm65, %v63, 0.0
    %67 = vadd.xlane.f32.xlu0 %v66
    %v68 = vpop.xlane.xlu0 %67
    %v69 = vsel %vm65, %v64, 0.0
    %70 = vadd.xlane.f32.xlu0 %v69
    %v71 = vpop.xlane.xlu0 %70
    %v72 = vrcp.pop 32.0
    %v73 = vmul.f32 %v68, %v72
    %v74 = vmul.f32 %v71, %v72
    %v75 = vsub.f32 %v63, %v73
    %v76 = vsub.f32 %v64, %v74
    %v77 = vmul.f32 %v75, %v75
    %v78 = vmul.f32 %v76, %v76
    %v79 = vsel %vm65, %v77, 0.0
    %80 = vadd.xlane.f32.xlu0 %v79
    %v81 = vpop.xlane.xlu0 %80
    %v82 = vsel %vm65, %v78, 0.0
    %83 = vadd.xlane.f32.xlu0 %v82
    %v84 = vpop.xlane.xlu0 %83
    %v85 = vrcp.pop 31.0
    %v86 = vmul.f32 %v81, %v85
    %v87 = vmul.f32 %v84, %v85
    %v88 = vrsqrt.pop %v86
    %v89 = vmul.f32 %v86, %v88
    %vm90 = vcmp.eq.f32.partialorder %v86, inf
    %v91 = vsel %vm90, %v86, %v89
    %vm92 = vcmp.eq.f32.partialorder %v86, 0.0
    %v93 = vand.u32 %v86, 2147483648
    %v94 = vsel %vm92, %v93, %v91
    %v95 = vrsqrt.pop %v87
    %v96 = vmul.f32 %v87, %v95
    %vm97 = vcmp.eq.f32.partialorder %v87, inf
    %v98 = vsel %vm97, %v87, %v96
    %vm99 = vcmp.eq.f32.partialorder %v87, 0.0
    %v100 = vand.u32 %v87, 2147483648
    %v101 = vsel %vm99, %v100, %v98
    %v102 = vadd.f32 %v94, 1e-06
    %v103 = vadd.f32 %v101, 1e-06
    %v104 = vrcp.pop %v102
    %v105 = vrcp.pop %v103
    %s106 = sld [smem:[#allocation2]]
    %v107 = vstv %s106
    %v108 = vmul.f32 %v107, %v75
    %v109 = vmul.f32 %v107, %v76
    %v110 = vmul.f32 %v108, %v104
    %v111 = vmul.f32 %v109, %v105
    %s112 = sld [smem:[#allocation3]]
    %v113 = vstv %s112
    %v114 = vadd.f32 %v110, %v113
    %v115 = vadd.f32 %v111, %v113
    %v116 = vpack.c.bf16 %v115, %v114
    %v117 = vld [vmem:[#allocation7] sm:$0xf]
    %v118 = vld [vmem:[#allocation7 + $0x4] sm:$0xf]
    %v119 = vld [vmem:[#allocation7 + $0x8] sm:$0xf]
    %v120 = vld [vmem:[#allocation7 + $0xc] sm:$0xf]
    %v121 = vld [vmem:[#allocation9] sm:$0x1]
    %v123 = vlaneseq
    %v124 = vshrl.u32 %v123, 7
    %v125 = vsub.s32 0, %v124
    %v126 = vrot.slane %v121, %v125
    %v132 = vunpack.c.l.b16 %v117
    %v133 = vunpack.c.l.b16 %v118
    %v134 = vunpack.c.l.b16 %v119
    %v135 = vunpack.c.l.b16 %v120
    %v136 = vpack.c.b16 %v133, %v132
    %v137 = vpack.c.b16 %v135, %v134
    %v141 = vsel %vm65, %v116, 0
    %143 = vmatprep.subr.bf16.mxu0 0
    %144 = vmatpush1.bf16.msra.mxu0 %v136
    %145 = vmatprep.subr.bf16.mxu0 0
    %146 = vmatpush1.bf16.msra.mxu0 %v137
    %147 = vmatprep.subr.bf16.mxu0 0
    %148 = vmatpush1.bf16.msra.mxu0 0
    %149 = vmatprep.subr.bf16.mxu0 0
    %150 = vmatpush1.bf16.msra.mxu0 0
    %151 = vmatprep.subr.bf16.mxu0 0
    %152 = vmatpush1.bf16.msra.mxu0 0
    %153 = vmatprep.subr.bf16.mxu0 0
    %154 = vmatpush1.bf16.msra.mxu0 0
    %155 = vmatprep.subr.bf16.mxu0 0
    %156 = vmatpush1.bf16.msra.mxu0 0
    %157 = vmatprep.subr.bf16.mxu0 0
    %158 = vmatpush1.bf16.msra.mxu0 0
    %159 = vmatprep.subr.bf16.mxu0 0
    %160 = vmatpush1.bf16.msra.mxu0 0
    %161 = vmatprep.subr.bf16.mxu0 0
    %162 = vmatpush1.bf16.msra.mxu0 0
    %163 = vmatprep.subr.bf16.mxu0 0
    %164 = vmatpush1.bf16.msra.mxu0 0
    %165 = vmatprep.subr.bf16.mxu0 0
    %166 = vmatpush1.bf16.msra.mxu0 0
    %167 = vmatprep.subr.bf16.mxu0 0
    %168 = vmatpush1.bf16.msra.mxu0 0
    %169 = vmatprep.subr.bf16.mxu0 0
    %170 = vmatpush1.bf16.msra.mxu0 0
    %171 = vmatprep.subr.bf16.mxu0 0
    %172 = vmatpush1.bf16.msra.mxu0 0
    %173 = vmatprep.subr.bf16.mxu0 0
    %174 = vmatpush1.bf16.msra.mxu0 0
    %175 = vmatprep.mubr.bf16.mxu0 0
    %176 = vmatmul.mubr.bf16.gmra.mrb[0].mxu0 %v141
    %v177 = vpop.f32.mrb[0].mxu0
    %v178 = vadd.f32 %v126, %v177
    %v179 = vpop.f32.mrb[0].mxu0
    %v180 = vpop.f32.mrb[0].mxu0
    %v181 = vadd.f32 %v126, %v180
    %v182 = vpop.f32.mrb[0].mxu0
    %183 = vdwg.mxu0
    %v184 = vadd.f32 %v63, %v178
    %v185 = vadd.f32 %v64, %v181
    %186 = vst.msk [vmem:[#allocation10] sm:$0xff] %vm65, %v184
    %187 = vst.msk [vmem:[#allocation10 + $0x8] sm:$0xff] %vm65, %v185
    // Predicated region
    $region34: #{tpu_custom_call.1} parent=1 // pred_check
      _
    $region35: #{tpu_custom_call.1} parent=1 // pred_check_branch
      %189 = sbr.rel (0) target = $region37
    $region36: #{tpu_custom_call.1} parent=1 // pred_region
      %s191 = ssub.s32 256, 256
      %192 = vsyncadd [#allocation6], %s191
      %s193 = sshll.u32 [#allocation10], 4
      %s194 = int_to_ptr.vmem [resolvable:$true] %s193
      %199 = dma.vmem_to_hbm [thread:$0]  %s194, 256, %s5, [#allocation6], 128, 128, 8
    $region37: #{tpu_custom_call.1} parent=1 // pred_fallthru
      _
    // Predicated region
    $region38: #{tpu_custom_call.1} parent=1 // pred_check
      _
    $region39: #{tpu_custom_call.1} parent=1 // pred_check_branch
      %201 = sbr.rel (0) target = $region41
    $region40: #{tpu_custom_call.1} parent=1 // pred_region
      %202 = dma.done [#allocation6], 256
    $region41: #{tpu_custom_call.1} parent=1 // pred_fallthru
      _
    %203 = vsyncpa [#allocation5], 1
    %204 = vsyncpa [#allocation8], 1
    %205 = vsyncpa [#allocation6], 1

</llo_original>
